<compile_context>
chip_gen: v6e
topology: v6e:2x2x1
jax: 0.10.0
libtpu: 0.0.40
codegen_flags: <defaults>
</compile_context>

<pallas_src>
import jax
import jax.numpy as jnp
from jax.experimental import pallas as pl
import numpy as np


def time_embeddings_kernel(x_ref, tab_ref, w1_ref, w2_ref, o_ref):
    # x_ref : (B, 1) f32 timesteps
    # tab_ref: (4, hidden) f32  rows = [freqs2 | phase | b1 | b2]
    #          (freqs2/phase occupy the first in_channels lanes, rest is 0)
    # w1_ref : (in_channels, hidden) bf16
    # w2_ref : (hidden, hidden)      bf16
    # o_ref  : (B, hidden) f32
    in_channels = w1_ref.shape[0]

    tab = tab_ref[...]                                   # (4, hidden) f32
    freqs2 = tab[0:1, :in_channels]                      # (1, in_channels)
    phase = tab[1:2, :in_channels]                       # (1, in_channels)
    b1 = tab[2:3, :]                                     # (1, hidden)
    b2 = tab[3:4, :]                                     # (1, hidden)

    # Sinusoidal embedding without a lane-axis concat:
    #   first half lanes  -> cos(t*f - pi/2) == sin(t*f)
    #   second half lanes -> cos(t*f)
    cat = jnp.cos(x_ref[...] * freqs2 + phase)           # (B, in_channels) f32

    # Linear 1 (bf16 operands, f32 accumulation) + Swish (f32)
    h = jnp.dot(cat.astype(jnp.bfloat16), w1_ref[...],
                preferred_element_type=jnp.float32) + b1
    h = h * jax.nn.sigmoid(h)                            # Swish: x * sigmoid(x)

    # Linear 2 (bf16 operands, f32 accumulation)
    o_ref[...] = jnp.dot(h.astype(jnp.bfloat16), w2_ref[...],
                         preferred_element_type=jnp.float32) + b2


@jax.jit
def time_embeddings(x, table, w1_bf16, w2_bf16):
    """x: (B,) f32 timesteps. Returns (B, hidden) f32, hidden = 4*in_channels."""
    B = x.shape[0]
    in_channels, hidden = w1_bf16.shape
    x2d = x.astype(jnp.float32).reshape(B, 1)

    full = lambda shape: pl.BlockSpec(shape, lambda: tuple(0 for _ in shape))

    cost = pl.CostEstimate(
        flops=2 * B * (in_channels * hidden + hidden * hidden),
        transcendentals=B * (in_channels + hidden),
        bytes_accessed=(x2d.size * 4 + table.size * 4
                        + w1_bf16.size * 2 + w2_bf16.size * 2
                        + B * hidden * 4),
    )

    return pl.pallas_call(
        time_embeddings_kernel,
        out_shape=jax.ShapeDtypeStruct((B, hidden), jnp.float32),
        grid=(),
        in_specs=[
            full((B, 1)),
            full((4, hidden)),
            full((in_channels, hidden)),
            full((hidden, hidden)),
        ],
        out_specs=full((B, hidden)),
        cost_estimate=cost,
    )(x2d, table, w1_bf16, w2_bf16)


def init_params(key, in_channels):
    """Deterministic init matching nn.Linear shapes (stored pre-transposed, f32)."""
    hidden = in_channels * 4
    k1, k2, k3, k4 = jax.random.split(key, 4)
    lim1 = 1.0 / np.sqrt(in_channels)
    lim2 = 1.0 / np.sqrt(hidden)
    w1 = jax.random.uniform(k1, (in_channels, hidden), jnp.float32, -lim1, lim1)
    b1 = jax.random.uniform(k2, (1, hidden), jnp.float32, -lim1, lim1)
    w2 = jax.random.uniform(k3, (hidden, hidden), jnp.float32, -lim2, lim2)
    b2 = jax.random.uniform(k4, (1, hidden), jnp.float32, -lim2, lim2)
    return w1, b1, w2, b2


def prepare_params(params_f32, in_channels):
    """Pack freqs2/phase/b1/b2 into one (4, hidden) f32 table; weights -> bf16."""
    w1, b1, w2, b2 = params_f32
    hidden = in_channels * 4
    half = in_channels // 2
    assert half > 1, "in_channels must be >= 4 (log-spaced freqs need half > 1)"

    factor = np.log(10000.0) / (half - 1)
    freqs = np.exp(np.arange(half, dtype=np.float32) * -factor)
    freqs2 = np.concatenate([freqs, freqs]).astype(np.float32)       # (in_channels,)
    phase = np.concatenate([np.full(half, -np.pi / 2, np.float32),
                            np.zeros(half, np.float32)])             # (in_channels,)

    table_np = np.zeros((4, hidden), np.float32)
    table_np[0, :in_channels] = freqs2
    table_np[1, :in_channels] = phase
    table = jnp.asarray(table_np)
    table = table.at[2, :].set(b1.reshape(-1))
    table = table.at[3, :].set(b2.reshape(-1))

    return table, w1.astype(jnp.bfloat16), w2.astype(jnp.bfloat16)


def reference_f32(x, params, in_channels):
    """Pure-JAX f32 reference of the torch forward (only_mlp=False path)."""
    half = in_channels // 2
    factor = np.log(10000.0) / (half - 1)
    freqs = jnp.exp(jnp.arange(half, dtype=jnp.float32) * -factor)
    emb = x[:, None] * freqs[None, :]
    cat = jnp.concatenate([jnp.sin(emb), jnp.cos(emb)], axis=1)
    w1, b1, w2, b2 = params
    h = cat @ w1 + b1
    h = h * jax.nn.sigmoid(h)
    return h @ w2 + b2


def reference_bf16(x, table, w1_bf16, w2_bf16):
    """Reference emulating exactly the kernel's numerics (bf16 operands, f32 acc)."""
    in_channels, _ = w1_bf16.shape
    freqs2 = table[0:1, :in_channels]
    phase = table[1:2, :in_channels]
    b1 = table[2:3, :]
    b2 = table[3:4, :]
    cat = jnp.cos(x[:, None].astype(jnp.float32) * freqs2 + phase)
    h = jnp.dot(cat.astype(jnp.bfloat16), w1_bf16,
                preferred_element_type=jnp.float32) + b1
    h = h * jax.nn.sigmoid(h)
    return jnp.dot(h.astype(jnp.bfloat16), w2_bf16,
                   preferred_element_type=jnp.float32) + b2


if __name__ == "__main__":
    in_channels = 32          # -> half = 16, hidden = 128
    batch = 8

    key = jax.random.PRNGKey(0)
    k_x, k_p = jax.random.split(key)
    # timesteps: small positive floats, like diffusion step indices
    x = jax.random.randint(k_x, (batch,), 0, 1000).astype(jnp.float32)
    params = init_params(k_p, in_channels)
    table, w1_bf16, w2_bf16 = prepare_params(params, in_channels)

    out = time_embeddings(x, table, w1_bf16, w2_bf16)
    out = jax.block_until_ready(out)

    assert out.shape == (batch, in_channels * 4)

    # Tight check vs. a reference with identical numerics (bf16 operands, f32 acc).
    ref_b = reference_bf16(x, table, w1_bf16, w2_bf16)
    assert jnp.allclose(out, ref_b, atol=2e-3, rtol=2e-3), (
        f"max diff vs bf16 ref: {jnp.max(jnp.abs(out - ref_b))}")

    # Loose check vs. the faithful f32 torch-semantics reference
    # (bf16 operand rounding makes 1e-5 tolerances too tight by design).
    ref_f = reference_f32(x, params, in_channels)
    assert jnp.allclose(out, ref_f, atol=7e-2, rtol=7e-2), (
        f"max diff vs f32 ref: {jnp.max(jnp.abs(out - ref_f))}")

    print("KERNEL_OK")
</pallas_src>

<mosaic_0001>
module attributes {stable_mosaic.version = 11 : i64} {
  func.func @time_embeddings_kernel(%arg0: memref<8x1xf32, #tpu.memory_space<vmem>>, %arg1: memref<4x128xf32, #tpu.memory_space<vmem>>, %arg2: memref<32x128xbf16, #tpu.memory_space<vmem>>, %arg3: memref<128x128xbf16, #tpu.memory_space<vmem>>, %arg4: memref<8x128xf32, #tpu.memory_space<vmem>>) attributes {dimension_semantics = [], scalar_prefetch = 0 : i64, scratch_operands = 0 : i64, tpu.core_type = #tpu.core_type<tc>} {
    %c0 = arith.constant 0 : index
    %c0_0 = arith.constant 0 : index
    %0 = vector.load %arg1[%c0, %c0_0] : memref<4x128xf32, #tpu.memory_space<vmem>>, vector<4x128xf32>
    %1 = vector.extract_strided_slice %0 {offsets = [0, 0], sizes = [1, 32], strides = [1, 1]} : vector<4x128xf32> to vector<1x32xf32>
    %2 = vector.extract_strided_slice %0 {offsets = [1, 0], sizes = [1, 32], strides = [1, 1]} : vector<4x128xf32> to vector<1x32xf32>
    %3 = vector.extract_strided_slice %0 {offsets = [2, 0], sizes = [1, 128], strides = [1, 1]} : vector<4x128xf32> to vector<1x128xf32>
    %4 = vector.extract_strided_slice %0 {offsets = [3, 0], sizes = [1, 128], strides = [1, 1]} : vector<4x128xf32> to vector<1x128xf32>
    %c0_1 = arith.constant 0 : index
    %c0_2 = arith.constant 0 : index
    %5 = vector.load %arg0[%c0_1, %c0_2] : memref<8x1xf32, #tpu.memory_space<vmem>>, vector<8x1xf32>
    %6 = vector.broadcast %5 : vector<8x1xf32> to vector<8x32xf32>
    %7 = vector.broadcast %1 : vector<1x32xf32> to vector<8x32xf32>
    %8 = arith.mulf %6, %7 : vector<8x32xf32>
    %9 = vector.broadcast %2 : vector<1x32xf32> to vector<8x32xf32>
    %10 = arith.addf %8, %9 : vector<8x32xf32>
    %11 = math.cos %10 : vector<8x32xf32>
    %12 = arith.truncf %11 : vector<8x32xf32> to vector<8x32xbf16>
    %c0_3 = arith.constant 0 : index
    %c0_4 = arith.constant 0 : index
    %13 = vector.load %arg2[%c0_3, %c0_4] : memref<32x128xbf16, #tpu.memory_space<vmem>>, vector<32x128xbf16>
    %cst = arith.constant dense<0.000000e+00> : vector<8x128xf32>
    %14 = tpu.matmul %12, %13, %cst {dimension_numbers = #tpu.dot_dimension_numbers<[1], [0], [0], [1], [0, 0, 1, 1], [], []>} : vector<8x32xbf16>, vector<32x128xbf16>, vector<8x128xf32> -> vector<8x128xf32>
    %15 = vector.broadcast %3 : vector<1x128xf32> to vector<8x128xf32>
    %16 = arith.addf %14, %15 : vector<8x128xf32>
    %17 = arith.negf %16 : vector<8x128xf32>
    %18 = math.exp %17 : vector<8x128xf32>
    %cst_5 = arith.constant 1.000000e+00 : f32
    %19 = vector.broadcast %cst_5 : f32 to vector<8x128xf32>
    %20 = arith.addf %19, %18 : vector<8x128xf32>
    %21 = arith.divf %19, %20 : vector<8x128xf32>
    %22 = arith.mulf %16, %21 : vector<8x128xf32>
    %23 = arith.truncf %22 : vector<8x128xf32> to vector<8x128xbf16>
    %c0_6 = arith.constant 0 : index
    %c0_7 = arith.constant 0 : index
    %24 = vector.load %arg3[%c0_6, %c0_7] : memref<128x128xbf16, #tpu.memory_space<vmem>>, vector<128x128xbf16>
    %cst_8 = arith.constant dense<0.000000e+00> : vector<8x128xf32>
    %25 = tpu.matmul %23, %24, %cst_8 {dimension_numbers = #tpu.dot_dimension_numbers<[1], [0], [0], [1], [0, 0, 1, 1], [], []>} : vector<8x128xbf16>, vector<128x128xbf16>, vector<8x128xf32> -> vector<8x128xf32>
    %26 = vector.broadcast %4 : vector<1x128xf32> to vector<8x128xf32>
    %27 = arith.addf %25, %26 : vector<8x128xf32>
    %c0_9 = arith.constant 0 : index
    %c0_10 = arith.constant 0 : index
    %28 = vector.load %arg4[%c0_9, %c0_10] : memref<8x128xf32, #tpu.memory_space<vmem>>, vector<8x128xf32>
    tpu.vector_store %arg4[%c0_9, %c0_10], %27 {strides = array<i32>} : memref<8x128xf32, #tpu.memory_space<vmem>>, vector<8x128xf32>,
    return
  }
}

</mosaic_0001>

<llo_original>
// kernel: time_embeddings.1
$region0: #{time_embeddings.1}
  #allocation0 [shape = 'u32[]', space=smem, size = 0x4, offset = 0x4, fixed_abs, tag = 'smem constant byte address 0x4 - core index']
  #allocation1 [shape = 'u32[144,128]{1,0:T(1,128)}', space=vmem, size = 0x12000, scoped, tag = 'internal scratch']
  %s0 = inlined_call_operand.vmem [shape: f32[8,1], index: 0, kind: input, shape index: {}]
  %s1 = inlined_call_operand.vmem [shape: f32[4,128], index: 1, kind: input, shape index: {}]
  %s2 = inlined_call_operand.hbm [shape: bf16[32,128], index: 2, kind: input, shape index: {}]
  %s3 = inlined_call_operand.hbm [shape: bf16[128,128], index: 3, kind: input, shape index: {}]
  %s4 = inlined_call_operand.hbm [shape: f32[8,128], index: 4, kind: output, shape index: {}]
  %s5 = sld [smem:[#allocation0]]
  $region34: #{time_embeddings.1} parent=0
    _
  %s7 = ssub.s32 1, %s5
  %s8 = scalar_select 0, %s7, %s5
  $region1: #{time_embeddings.1} parent=0
    #allocation2 [shape = 'u8[8192]{0}', space=vmem, size = 0x2000, scoped, tag = 'input window, operand 2, single buffered']
    #allocation3 [shape = 's32[1]{0}', space=sflag, size = 0x4, scoped, tag = 'scoped memory for time_embeddings.1']
    #allocation4 [shape = 's32[1]{0}', space=sflag, size = 0x4, scoped, tag = 'scoped memory for time_embeddings.1']
    #allocation5 [shape = 'u8[32768]{0}', space=vmem, size = 0x8000, scoped, tag = 'input window, operand 3, single buffered']
    #allocation6 [shape = 's32[1]{0}', space=sflag, size = 0x4, scoped, tag = 'scoped memory for time_embeddings.1']
    #allocation7 [shape = 'u8[4096]{0}', space=vmem, size = 0x1000, scoped, tag = 'output window, operand 0, single buffered']
    %9 = vsyncpa [#allocation3], 0
    %10 = vsyncpa [#allocation6], 0
    %11 = vsyncpa [#allocation4], 0
    // Predicated region
    $region2: #{time_embeddings.1} parent=1 // pred_check
      _
    $region3: #{time_embeddings.1} parent=1 // pred_check_branch
      %13 = sbr.rel (0) target = $region5
    $region4: #{time_embeddings.1} parent=1 // pred_region
      _
    $region5: #{time_embeddings.1} parent=1 // pred_fallthru
      _
    // Predicated region
    $region6: #{time_embeddings.1} parent=1 // pred_check
      _
    $region7: #{time_embeddings.1} parent=1 // pred_check_branch
      %15 = sbr.rel (0) target = $region9
    $region8: #{time_embeddings.1} parent=1 // pred_region
      _
    $region9: #{time_embeddings.1} parent=1 // pred_fallthru
      _
    // Predicated region
    $region10: #{time_embeddings.1} parent=1 // pred_check
      _
    $region11: #{time_embeddings.1} parent=1 // pred_check_branch
      %17 = sbr.rel (0) target = $region13
    $region12: #{time_embeddings.1} parent=1 // pred_region
      %s19 = ssub.s32 256, 256
      %20 = vsyncadd [#allocation3], %s19
      %s21 = sshll.u32 [#allocation2], 4
      %s22 = int_to_ptr.vmem [resolvable:$true] %s21
      %27 = dma.hbm_to_vmem [thread:$0]  %s2, 256, %s22, [#allocation3], 64, 64, 4
    $region13: #{time_embeddings.1} parent=1 // pred_fallthru
      _
    // Predicated region
    $region14: #{time_embeddings.1} parent=1 // pred_check
      _
    $region15: #{time_embeddings.1} parent=1 // pred_check_branch
      %29 = sbr.rel (0) target = $region17
    $region16: #{time_embeddings.1} parent=1 // pred_region
      %s31 = ssub.s32 1024, 1024
      %32 = vsyncadd [#allocation6], %s31
      %s33 = sshll.u32 [#allocation5], 4
      %s34 = int_to_ptr.vmem [resolvable:$true] %s33
      %39 = dma.hbm_to_vmem [thread:$0]  %s3, 1024, %s34, [#allocation6], 64, 64, 4
    $region17: #{time_embeddings.1} parent=1 // pred_fallthru
      _
    // Predicated region
    $region18: #{time_embeddings.1} parent=1 // pred_check
      _
    $region19: #{time_embeddings.1} parent=1 // pred_check_branch
      %41 = sbr.rel (0) target = $region21
    $region20: #{time_embeddings.1} parent=1 // pred_region
      %42 = dma.done [#allocation3], 256
    $region21: #{time_embeddings.1} parent=1 // pred_fallthru
      _
    // Predicated region
    $region22: #{time_embeddings.1} parent=1 // pred_check
      _
    $region23: #{time_embeddings.1} parent=1 // pred_check_branch
      %44 = sbr.rel (0) target = $region25
    $region24: #{time_embeddings.1} parent=1 // pred_region
      %45 = dma.done [#allocation6], 1024
    $region25: #{time_embeddings.1} parent=1 // pred_fallthru
      _
    %v47 = vld [vmem:[%s1] sm:$0xf]
    %v48 = vld [vmem:[%s0] sm:$0xff]
    %50 = vset.pattern.permute.xlu0 0
    %51 = vperm.xlu0 %50, %v48
    %v52 = vpop.permute.xlu0 %51
    %v54 = vlaneseq
    %v55 = vshrl.u32 %v54, 7
    %v56 = vsub.s32 0, %v55
    %v57 = vrot.slane %v47, %v56
    %v58 = vmul.f32 %v52, %v57
    %v59 = vlaneseq
    %v60 = vshrl.u32 %v59, 7
    %v61 = vsub.s32 1, %v60
    %v62 = vrot.slane %v47, %v61
    %v63 = vadd.f32 %v58, %v62
    %v64 = vand.u32 2147483647, %v63
    %vm65 = vcmp.le.f32.partialorder %v64, 0.7853982
    %vm66 = vcmp.lt.s32.totalorder %v63, 0
    %v67 = vand.u32 %v63, 2139095040
    %v68 = vshrl.u32 %v67, 23
    %v69 = vsub.s32 %v68, 127
    %v70 = vand.u32 2147483647, %v63
    %v71 = vand.u32 %v70, 8388607
    %v72 = vor.u32 %v71, 8388608
    %v73 = vsub.s32 0, %v72
    %v74 = vadd.s32 %v69, 1
    %vm75 = vcmp.gt.s32.totalorder %v74, 0
    %v76 = vsel %vm75, %v74, 0
    %v77 = vshrl.u32 %v76, 5
    %v78 = vand.u32 %v76, 31
    %v79 = vsub.s32 32, %v78
    %v80 = vshrl.u32 683565275, %v79
    %v81 = vshll.u32 683565275, %v78
    %v82 = vshrl.u32 2475754826, %v79
    %v83 = vor.u32 %v81, %v82
    %v84 = vshll.u32 2475754826, %v78
    %v85 = vshrl.u32 2131351028, %v79
    %v86 = vor.u32 %v84, %v85
    %v87 = vshll.u32 2131351028, %v78
    %v88 = vshrl.u32 2102212464, %v79
    %v89 = vor.u32 %v87, %v88
    %v90 = vshll.u32 2102212464, %v78
    %v91 = vshrl.u32 920167782, %v79
    %v92 = vor.u32 %v90, %v91
    %v93 = vshll.u32 920167782, %v78
    %v94 = vshrl.u32 1326507024, %v79
    %v95 = vor.u32 %v93, %v94
    %vm96 = vcmp.lt.s32.totalorder %v77, 1
    %vm97 = vcmp.lt.s32.totalorder %v77, 2
    %vm98 = vcmp.lt.s32.totalorder %v77, 3
    %vm99 = vcmp.lt.s32.totalorder %v77, 4
    %v100 = vsel %vm96, %v80, %v83
    %v101 = vsel %vm99, %v89, 2102212464
    %v102 = vsel %vm98, %v86, %v101
    %v103 = vsel %vm97, %v100, %v102
    %v104 = vsel %vm96, %v83, %v86
    %v105 = vsel %vm99, %v92, 920167782
    %v106 = vsel %vm98, %v89, %v105
    %v107 = vsel %vm97, %v104, %v106
    %v108 = vsel %vm96, %v86, %v89
    %v109 = vsel %vm99, %v95, 1326507024
    %v110 = vsel %vm98, %v92, %v109
    %v111 = vsel %vm97, %v108, %v110
    %v112 = vshll.u32 %v72, 8
    %v113 = vmul.u32.u64.compose %v112, %v111
    %v114 = vextract.low.u32 %v113
    %v115 = vextract.high.u32 %v113
    %v116 = vmul.u32.u64.compose %v112, %v107
    %v117 = vextract.low.u32 %v116
    %v118 = vextract.high.u32 %v116
    %v119 = vmul.u32 %v112, %v103
    %v120 = vadd.s32 %v115, %v117
    %vm121 = vc.u32 %v115, %v117
    %v122 = vadd.s32 %v118, 1
    %v123 = vsel %vm121, %v122, %v118
    %v124 = vadd.s32 %v119, %v123
    %v125 = vadd.s32 %v124, 536870912
    %v126 = vshrl.u32 %v125, 30
    %v127 = vshll.u32 %v126, 30
    %v128 = vsub.s32 %v124, %v127
    %vm129 = vcmp.lt.s32.totalorder %v128, 0
    %v130 = vsub.s32 0, %v128
    %v131 = vsel %vm129, %v130, %v128
    %v132 = vclz %v131
    %v133 = vsub.s32 %v132, 2
    %vm134 = vcmp.gt.s32.totalorder 0, %v133
    %v135 = vsel %vm134, 0, %v133
    %v136 = vsub.s32 32, %v135
    %v137 = vshll.u32 %v128, %v135
    %v138 = vshrl.u32 %v120, %v136
    %v139 = vor.u32 %v137, %v138
    %v140 = vsub.s32 4294967266, %v135
    %v141 = vadd.s32 %v140, 127
    %v142 = vshll.u32 %v141, 23
    %v143 = vor.u32 4788187, %v142
    %v144 = vand.u32 2147483647, %v143
    %v146 = vcvt.s32.f32 %v139
    %v147 = vmul.f32 %v146, %v144
    %v148 = vxor.u32 %v147, 2147483648
    %v149 = vsel %vm66, %v148, %v147
    %v150 = vsub.s32 4, %v126
    %v151 = vsel %vm66, %v150, %v126
    %v152 = vsel %vm65, %v63, %v149
    %v153 = vsel %vm65, 0, %v151
    %v154 = vcosq.f32.pop %v152
    %v155 = vsinq.f32.pop %v152
    %vm156 = vweird.f32 %v63
    %v157 = vand.u32 %v153, 3
    %vm158 = vcmp.lt.s32.totalorder %v157, 2
    %vm159 = vcmp.eq.s32.totalorder %v157, 0
    %v160 = vxor.u32 %v155, 2147483648
    %v161 = vsel %vm159, %v154, %v160
    %vm162 = vcmp.eq.s32.totalorder %v157, 2
    %v163 = vxor.u32 %v154, 2147483648
    %v164 = vsel %vm162, %v163, %v155
    %v165 = vsel %vm158, %v161, %v164
    %v166 = vsel %vm156, nan, %v165
    %v167 = vpack.c.bf16 %v166, %v166
    %v168 = vld [vmem:[#allocation2] sm:$0xf]
    %v169 = vld [vmem:[#allocation2 + $0x4] sm:$0xf]
    %v170 = vld [vmem:[#allocation2 + $0x8] sm:$0xf]
    %v171 = vld [vmem:[#allocation2 + $0xc] sm:$0xf]
    %v172 = vlaneseq
    %v173 = vshrl.u32 %v172, 7
    %v174 = vsub.s32 2, %v173
    %v175 = vrot.slane %v47, %v174
    %v180 = vunpack.c.l.b16 %v168
    %v181 = vunpack.c.l.b16 %v169
    %v182 = vunpack.c.l.b16 %v170
    %v183 = vunpack.c.l.b16 %v171
    %v184 = vpack.c.b16 %v181, %v180
    %v185 = vpack.c.b16 %v183, %v182
    %vm188 = vcmask 261120
    %v190 = vsel %vm188, %v167, 0
    %192 = vmatprep.subr.bf16.mxu0 0
    %193 = vmatpush1.bf16.msra.mxu0 0
    %194 = vmatprep.subr.bf16.mxu0 0
    %195 = vmatpush1.bf16.msra.mxu0 0
    %196 = vmatprep.subr.bf16.mxu0 0
    %197 = vmatpush1.bf16.msra.mxu0 0
    %198 = vmatprep.subr.bf16.mxu0 0
    %199 = vmatpush1.bf16.msra.mxu0 0
    %200 = vmatprep.subr.bf16.mxu0 0
    %201 = vmatpush1.bf16.msra.mxu0 0
    %202 = vmatprep.subr.bf16.mxu0 0
    %203 = vmatpush1.bf16.msra.mxu0 0
    %204 = vmatprep.subr.bf16.mxu0 0
    %205 = vmatpush1.bf16.msra.mxu0 %v185
    %206 = vmatprep.subr.bf16.mxu0 0
    %207 = vmatpush1.bf16.msra.mxu0 %v184
    %208 = vmatprep.subr.bf16.mxu0 0
    %209 = vmatpush2.bf16.msra.mxu0 0
    %210 = vmatprep.subr.bf16.mxu0 0
    %211 = vmatpush2.bf16.msra.mxu0 0
    %212 = vmatprep.subr.bf16.mxu0 0
    %213 = vmatpush2.bf16.msra.mxu0 0
    %214 = vmatprep.subr.bf16.mxu0 0
    %215 = vmatpush2.bf16.msra.mxu0 0
    %216 = vmatprep.subr.bf16.mxu0 0
    %217 = vmatpush2.bf16.msra.mxu0 0
    %218 = vmatprep.subr.bf16.mxu0 0
    %219 = vmatpush2.bf16.msra.mxu0 0
    %220 = vmatprep.subr.bf16.mxu0 0
    %221 = vmatpush2.bf16.msra.mxu0 0
    %222 = vmatprep.subr.bf16.mxu0 0
    %223 = vmatpush2.bf16.msra.mxu0 0
    %224 = vmatprep.mubr.bf16.mxu0 0
    %225 = vmatmul.mubr.bf16.gmra.mxu0 %v190
    %v226 = vpop.f32.mrf.mxu0
    %v227 = vadd.f32 %v175, %v226
    %v228 = vpop.f32.mrf.mxu0
    %v229 = vpop.f32.mrf.mxu0
    %v230 = vpop.f32.mrf.mxu0
    %231 = vdwg.mxu0
    %v232 = vxor.u32 %v227, 2147483648
    %v233 = vmul.f32 %v232, 1.442695
    %v234 = vpow.pop %v233
    %v235 = vadd.f32 %v234, 1.0
    %v236 = vrcp.pop %v235
    %v237 = vmul.f32 1.0, %v236
    %v238 = vmul.f32 %v227, %v237
    %v239 = vpack.c.bf16 %v238, %v238
    %v240 = vld [vmem:[#allocation5] sm:$0xf]
    %v241 = vld [vmem:[#allocation5 + $0x4] sm:$0xf]
    %v242 = vld [vmem:[#allocation5 + $0x8] sm:$0xf]
    %v243 = vld [vmem:[#allocation5 + $0xc] sm:$0xf]
    %v244 = vld [vmem:[#allocation5 + $0x10] sm:$0xf]
    %v245 = vld [vmem:[#allocation5 + $0x14] sm:$0xf]
    %v246 = vld [vmem:[#allocation5 + $0x18] sm:$0xf]
    %v247 = vld [vmem:[#allocation5 + $0x1c] sm:$0xf]
    %v248 = vld [vmem:[#allocation5 + $0x20] sm:$0xf]
    %v249 = vld [vmem:[#allocation5 + $0x24] sm:$0xf]
    %v250 = vld [vmem:[#allocation5 + $0x28] sm:$0xf]
    %v251 = vld [vmem:[#allocation5 + $0x2c] sm:$0xf]
    %v252 = vld [vmem:[#allocation5 + $0x30] sm:$0xf]
    %v253 = vld [vmem:[#allocation5 + $0x34] sm:$0xf]
    %v254 = vld [vmem:[#allocation5 + $0x38] sm:$0xf]
    %v255 = vld [vmem:[#allocation5 + $0x3c] sm:$0xf]
    %v256 = vlaneseq
    %v257 = vshrl.u32 %v256, 7
    %v258 = vsub.s32 3, %v257
    %v259 = vrot.slane %v47, %v258
    %v276 = vunpack.c.l.b16 %v240
    %v277 = vunpack.c.l.b16 %v241
    %v278 = vunpack.c.l.b16 %v242
    %v279 = vunpack.c.l.b16 %v243
    %v280 = vunpack.c.l.b16 %v244
    %v281 = vunpack.c.l.b16 %v245
    %v282 = vunpack.c.l.b16 %v246
    %v283 = vunpack.c.l.b16 %v247
    %v284 = vunpack.c.l.b16 %v248
    %v285 = vunpack.c.l.b16 %v249
    %v286 = vunpack.c.l.b16 %v250
    %v287 = vunpack.c.l.b16 %v251
    %v288 = vunpack.c.l.b16 %v252
    %v289 = vunpack.c.l.b16 %v253
    %v290 = vunpack.c.l.b16 %v254
    %v291 = vunpack.c.l.b16 %v255
    %v292 = vpack.c.b16 %v277, %v276
    %v293 = vpack.c.b16 %v279, %v278
    %v294 = vpack.c.b16 %v281, %v280
    %v295 = vpack.c.b16 %v283, %v282
    %v296 = vpack.c.b16 %v285, %v284
    %v297 = vpack.c.b16 %v287, %v286
    %v298 = vpack.c.b16 %v289, %v288
    %v299 = vpack.c.b16 %v291, %v290
    %308 = vmatprep.subr.bf16.mxu0 0
    %309 = vmatpush1.bf16.msra.mxu0 %v299
    %310 = vmatprep.subr.bf16.mxu0 0
    %311 = vmatpush1.bf16.msra.mxu0 %v298
    %312 = vmatprep.subr.bf16.mxu0 0
    %313 = vmatpush1.bf16.msra.mxu0 %v297
    %314 = vmatprep.subr.bf16.mxu0 0
    %315 = vmatpush1.bf16.msra.mxu0 %v296
    %316 = vmatprep.subr.bf16.mxu0 0
    %317 = vmatpush1.bf16.msra.mxu0 %v295
    %318 = vmatprep.subr.bf16.mxu0 0
    %319 = vmatpush1.bf16.msra.mxu0 %v294
    %320 = vmatprep.subr.bf16.mxu0 0
    %321 = vmatpush1.bf16.msra.mxu0 %v293
    %322 = vmatprep.subr.bf16.mxu0 0
    %323 = vmatpush1.bf16.msra.mxu0 %v292
    %324 = vmatprep.subr.bf16.mxu0 0
    %325 = vmatpush2.bf16.msra.mxu0 0
    %326 = vmatprep.subr.bf16.mxu0 0
    %327 = vmatpush2.bf16.msra.mxu0 0
    %328 = vmatprep.subr.bf16.mxu0 0
    %329 = vmatpush2.bf16.msra.mxu0 0
    %330 = vmatprep.subr.bf16.mxu0 0
    %331 = vmatpush2.bf16.msra.mxu0 0
    %332 = vmatprep.subr.bf16.mxu0 0
    %333 = vmatpush2.bf16.msra.mxu0 0
    %334 = vmatprep.subr.bf16.mxu0 0
    %335 = vmatpush2.bf16.msra.mxu0 0
    %336 = vmatprep.subr.bf16.mxu0 0
    %337 = vmatpush2.bf16.msra.mxu0 0
    %338 = vmatprep.subr.bf16.mxu0 0
    %339 = vmatpush2.bf16.msra.mxu0 0
    %340 = vmatprep.mubr.bf16.mxu0 0
    %341 = vmatmul.mubr.bf16.gmra.mxu0 %v239
    %v342 = vpop.f32.mrf.mxu0
    %v343 = vadd.f32 %v259, %v342
    %v344 = vpop.f32.mrf.mxu0
    %v345 = vpop.f32.mrf.mxu0
    %v346 = vpop.f32.mrf.mxu0
    %347 = vdwg.mxu0
    %348 = vst [vmem:[#allocation7] sm:$0xff] %v343
    // Predicated region
    $region26: #{time_embeddings.1} parent=1 // pred_check
      _
    $region27: #{time_embeddings.1} parent=1 // pred_check_branch
      %350 = sbr.rel (0) target = $region29
    $region28: #{time_embeddings.1} parent=1 // pred_region
      %s352 = ssub.s32 128, 128
      %353 = vsyncadd [#allocation4], %s352
      %s355 = sshll.u32 [#allocation7], 4
      %s356 = int_to_ptr.vmem [resolvable:$true] %s355
      %358 = dma.vmem_to_hbm [thread:$0]  %s356, 128, %s4, [#allocation4]
    $region29: #{time_embeddings.1} parent=1 // pred_fallthru
      _
    // Predicated region
    $region30: #{time_embeddings.1} parent=1 // pred_check
      _
    $region31: #{time_embeddings.1} parent=1 // pred_check_branch
      %360 = sbr.rel (0) target = $region33
    $region32: #{time_embeddings.1} parent=1 // pred_region
      %361 = dma.done [#allocation4], 128
    $region33: #{time_embeddings.1} parent=1 // pred_fallthru
      _
    %362 = vsyncpa [#allocation3], 1
    %363 = vsyncpa [#allocation6], 1
    %364 = vsyncpa [#allocation4], 1

</llo_original>
